<compile_context>
chip_gen: v5e
topology: v5e:2x2
jax: 0.10.0
libtpu: 0.0.40
codegen_flags: <defaults>
</compile_context>

<pallas_src>
import functools

import jax
import jax.numpy as jnp
from jax import lax
from jax.experimental import pallas as pl
from jax.experimental.pallas import tpu as pltpu

EPS = 1e-5
NEG_INF = -1e30          # f32 sentinel; avoids NaN on masked rows
MXU_DTYPE = jnp.bfloat16 # MXU operand dtype; accumulation stays f32


def _round_up(x, m):
    return (x + m - 1) // m * m


def make_cfg():
    """Generation-aware matmul tile defaults and VMEM budget."""
    try:
        vmem_cap = getattr(pltpu.get_tpu_info(), "vmem_capacity_bytes", None)
    except Exception:
        vmem_cap = None
    if vmem_cap is None:
        vmem_cap = 64 * 1024 * 1024
    if vmem_cap >= 100 * 1024 * 1024:
        # v5e / v6e: 128 MiB VMEM -> big tiles, generous scoped limit.
        return dict(tm=512, tn=512, tk=1024, vmem_limit=96 * 1024 * 1024)
    # v7x: 64 MiB per TensorCore -> keep the per-call budget well under it.
    return dict(tm=256, tn=256, tk=512, vmem_limit=40 * 1024 * 1024)


# ----------------------------- Pallas kernels -----------------------------

def _masked_ln(y, g, b, n_valid):
    """LayerNorm over the first n_valid lanes of a lane-padded tile."""
    lane = lax.broadcasted_iota(jnp.int32, y.shape, 1)
    valid = lane < n_valid
    inv_n = 1.0 / n_valid
    mu = jnp.sum(jnp.where(valid, y, 0.0), axis=-1, keepdims=True) * inv_n
    d = jnp.where(valid, y - mu, 0.0)
    var = jnp.sum(d * d, axis=-1, keepdims=True) * inv_n
    return d * lax.rsqrt(var + EPS) * g + b


def _linear_kernel(x_ref, w_ref, b_ref, o_ref, acc_ref, *, relu):
    """y = x @ w + b; K is the last (reduction) grid axis."""
    @pl.when(pl.program_id(2) == 0)
    def _():
        acc_ref[...] = jnp.zeros_like(acc_ref)

    acc_ref[...] += jnp.dot(x_ref[...].astype(MXU_DTYPE), w_ref[...],
                            preferred_element_type=jnp.float32)

    @pl.when(pl.program_id(2) == pl.num_programs(2) - 1)
    def _():
        y = acc_ref[...] + b_ref[...]
        if relu:
            y = jnp.maximum(y, 0.0)
        o_ref[...] = y


def _linear_ln_kernel(x_ref, w_ref, b_ref, r_ref, g_ref, bt_ref, o_ref,
                      acc_ref, *, n_valid):
    """y = LayerNorm(x @ w + b + residual): post-LN residual block fused
    into the matmul epilogue (requires the whole output row in one tile)."""
    @pl.when(pl.program_id(2) == 0)
    def _():
        acc_ref[...] = jnp.zeros_like(acc_ref)

    acc_ref[...] += jnp.dot(x_ref[...].astype(MXU_DTYPE), w_ref[...],
                            preferred_element_type=jnp.float32)

    @pl.when(pl.program_id(2) == pl.num_programs(2) - 1)
    def _():
        y = acc_ref[...] + b_ref[...] + r_ref[...]
        o_ref[...] = _masked_ln(y, g_ref[...], bt_ref[...], n_valid)


def _ln_kernel(x_ref, g_ref, b_ref, o_ref, *, n_valid):
    o_ref[...] = _masked_ln(x_ref[...], g_ref[...], b_ref[...], n_valid)


def _add_ln_kernel(x_ref, r_ref, g_ref, b_ref, o_ref, *, n_valid):
    o_ref[...] = _masked_ln(x_ref[...] + r_ref[...], g_ref[...], b_ref[...],
                            n_valid)


def _attn_kernel(q_ref, k_ref, v_ref, *rest, causal):
    """One (batch, head) pair per grid step.

    q_ref: (Sq, dh); k_ref/v_ref: (Sk, dh); optional bias_ref: (1, Sk)
    additive key-padding bias.  Scores/softmax stay f32; MXU operands bf16.
    Causal mask is generated in-kernel via iota.
    """
    # TODO(synk): for long sequences convert to a flash-style online-softmax
    # with an 'arbitrary' Sk grid axis; full (Sq, Sk) scores fit easily here.
    if len(rest) == 2:
        bias_ref, o_ref = rest
    else:
        bias_ref = None
        (o_ref,) = rest

    q = q_ref[...].astype(MXU_DTYPE)
    k = k_ref[...].astype(MXU_DTYPE)
    s = jnp.dot(q, k.T, preferred_element_type=jnp.float32)      # (Sq, Sk)
    if bias_ref is not None:
        s = s + bias_ref[...]
    if causal:
        Sq, Sk = s.shape
        qi = lax.broadcasted_iota(jnp.int32, (Sq, Sk), 0)
        ki = lax.broadcasted_iota(jnp.int32, (Sq, Sk), 1)
        s = jnp.where(ki > qi, NEG_INF, s)

    m = jnp.max(s, axis=-1, keepdims=True)
    p = jnp.exp(s - m)
    p = p * pl.reciprocal(jnp.sum(p, axis=-1, keepdims=True), approx=True)
    o_ref[...] = jnp.dot(p.astype(MXU_DTYPE), v_ref[...].astype(MXU_DTYPE),
                         preferred_element_type=jnp.float32)


# ----------------------------- Pallas wrappers -----------------------------

def layernorm_p(x, ln, n_valid, cfg, residual=None):
    """Standalone (masked) LayerNorm on a lane-padded activation.

    x: (rows, cols) f32, rows in {M, Mp}, cols in {E, Ep}; returns the padded
    (Mp, Ep) result (pad columns are zero).
    """
    g, b = ln
    Ep = g.shape[1]
    rows, cols = x.shape
    Mp = _round_up(rows, 8)
    if rows != Mp or cols != Ep:
        x = jnp.pad(x, ((0, Mp - rows), (0, Ep - cols)))
    if residual is not None:
        rr, rc = residual.shape
        if rr != Mp or rc != Ep:
            residual = jnp.pad(residual, ((0, Mp - rr), (0, Ep - rc)))

    tm = min(256, Mp)
    while Mp % tm:
        tm -= 8

    in_specs = [pl.BlockSpec((tm, Ep), lambda i: (i, 0))]
    args = [x]
    if residual is not None:
        in_specs.append(pl.BlockSpec((tm, Ep), lambda i: (i, 0)))
        args.append(residual)
    in_specs += [pl.BlockSpec((1, Ep), lambda i: (0, 0)),
                 pl.BlockSpec((1, Ep), lambda i: (0, 0))]
    args += [g, b]
    kernel = functools.partial(
        _ln_kernel if residual is None else _add_ln_kernel, n_valid=n_valid)

    return pl.pallas_call(
        kernel,
        out_shape=jax.ShapeDtypeStruct((Mp, Ep), jnp.float32),
        grid=(Mp // tm,),
        in_specs=in_specs,
        out_specs=pl.BlockSpec((tm, Ep), lambda i: (i, 0)),
        compiler_params=pltpu.CompilerParams(
            dimension_semantics=("parallel",),
            vmem_limit_bytes=cfg["vmem_limit"]),
    )(*args)


def linear_p(x, lin, cfg, residual=None, ln=None, relu=False):
    """Tiled y = x @ W + b on the MXU, optional fused LayerNorm(y + residual).

    x: (rows, cols) f32 with rows in {M, Mp} and cols in {K, Kp}; padded
    columns (if any) must be zero.  Returns the full padded (Mp, Op) f32
    output (pad columns zero) so consecutive linears chain with no
    re-pad / re-slice glue.
    """
    w, b = lin["w"], lin["b"]
    Kp, Op, tk, tn = lin["Kp"], lin["Op"], lin["tk"], lin["tn"]

    fuse_ln = (ln is not None) and (Op == tn)
    if ln is not None and not fuse_ln:
        # Output row spans several lane tiles: fall back to unfused add+LN.
        y = linear_p(x, lin, cfg, relu=relu)
        return layernorm_p(y, ln, lin["O"], cfg, residual=residual)

    rows, cols = x.shape
    tm = min(cfg["tm"], _round_up(rows, 8))
    Mp = _round_up(rows, tm)

    # Keep >=2 programs on the parallel grid axes (both v7x TensorCores busy).
    if (Mp // tm) * (Op // tn) < 2:
        for cand in ((tm // 2) // 8 * 8, 8):
            if cand >= 8 and Mp % cand == 0:
                tm = cand
                break

    if rows != Mp or cols != Kp:
        x = jnp.pad(x, ((0, Mp - rows), (0, Kp - cols)))

    in_specs = [pl.BlockSpec((tm, tk), lambda i, j, k: (i, k)),
                pl.BlockSpec((tk, tn), lambda i, j, k: (k, j)),
                pl.BlockSpec((1, tn), lambda i, j, k: (0, j))]
    args = [x, w, b]

    if fuse_ln:
        r = residual
        rr, rc = r.shape
        if rr != Mp or rc != Op:
            r = jnp.pad(r, ((0, Mp - rr), (0, Op - rc)))
        g, bt = ln
        in_specs += [pl.BlockSpec((tm, tn), lambda i, j, k: (i, j)),
                     pl.BlockSpec((1, tn), lambda i, j, k: (0, j)),
                     pl.BlockSpec((1, tn), lambda i, j, k: (0, j))]
        args += [r, g, bt]
        kernel = functools.partial(_linear_ln_kernel, n_valid=lin["O"])
    else:
        kernel = functools.partial(_linear_kernel, relu=relu)

    return pl.pallas_call(
        kernel,
        out_shape=jax.ShapeDtypeStruct((Mp, Op), jnp.float32),
        grid=(Mp // tm, Op // tn, Kp // tk),
        in_specs=in_specs,
        out_specs=pl.BlockSpec((tm, tn), lambda i, j, k: (i, j)),
        scratch_shapes=[pltpu.VMEM((tm, tn), jnp.float32)],
        compiler_params=pltpu.CompilerParams(
            dimension_semantics=("parallel", "parallel", "arbitrary"),
            vmem_limit_bytes=cfg["vmem_limit"]),
    )(*args)


def attention(q, k, v, cfg, pad_bias=None, causal=False):
    """q: (N, H, Sq, dh), k/v: (N, H, Sk, dh) f32 (q already 1/sqrt(dh)-scaled
    via the folded projection weights).  Grid = (N, H), both parallel."""
    N, H, Sq, dh = q.shape
    Sk = k.shape[2]

    in_specs = [pl.BlockSpec((None, None, Sq, dh), lambda b, h: (b, h, 0, 0)),
                pl.BlockSpec((None, None, Sk, dh), lambda b, h: (b, h, 0, 0)),
                pl.BlockSpec((None, None, Sk, dh), lambda b, h: (b, h, 0, 0))]
    args = [q, k, v]
    if pad_bias is not None:
        in_specs.append(pl.BlockSpec((None, 1, Sk), lambda b, h: (b, 0, 0)))
        args.append(pad_bias)

    return pl.pallas_call(
        functools.partial(_attn_kernel, causal=causal),
        out_shape=jax.ShapeDtypeStruct((N, H, Sq, dh), jnp.float32),
        grid=(N, H),
        in_specs=in_specs,
        out_specs=pl.BlockSpec((None, None, Sq, dh), lambda b, h: (b, h, 0, 0)),
        compiler_params=pltpu.CompilerParams(
            dimension_semantics=("parallel", "parallel"),
            vmem_limit_bytes=cfg["vmem_limit"]),
    )(*args)


# --------------------------- Transformer pieces ---------------------------

def mha(q_x, kv_x, Sq, Sk, N, aprm, H, E, cfg, pad_bias=None, causal=False,
        cross=False):
    """Multi-head attention up to (but not including) the output projection;
    the out-projection is fused with the residual+LN by the caller.

    q_x / kv_x are flattened (rows, cols) activations (may be lane/row
    padded).  Returns the heads-merged attention output (Sq*N, E) f32.
    """
    dh = E // H
    Mq, Mk = Sq * N, Sk * N

    if cross:
        qp = linear_p(q_x, aprm["q_proj"], cfg)
        q = qp[:Mq, :E]
        kvp = linear_p(kv_x, aprm["kv_proj"], cfg)
        Oc = aprm["kv_proj"]["Ocp"]
        k = kvp[:Mk, 0 * Oc:0 * Oc + E]
        v = kvp[:Mk, 1 * Oc:1 * Oc + E]
    else:
        qkv = linear_p(q_x, aprm["in_proj"], cfg)      # fused Q|K|V projection
        Oc = aprm["in_proj"]["Ocp"]
        q = qkv[:Mq, 0 * Oc:0 * Oc + E]
        k = qkv[:Mq, 1 * Oc:1 * Oc + E]
        v = qkv[:Mq, 2 * Oc:2 * Oc + E]

    # (S*N, E) -> (N, H, S, dh): small relayout per tensor.
    # TODO(synk): a fully DMA-side head split needs the head axis as a leading
    # HBM dim (TPU BlockSpec last-two-dims constraint); not worth it at dh=8.
    q = q.reshape(Sq, N, H, dh).transpose(1, 2, 0, 3)
    k = k.reshape(Sk, N, H, dh).transpose(1, 2, 0, 3)
    v = v.reshape(Sk, N, H, dh).transpose(1, 2, 0, 3)

    o = attention(q, k, v, cfg, pad_bias=pad_bias, causal=causal)
    return o.transpose(2, 0, 1, 3).reshape(Sq * N, E)


def encoder_layer(x, S, N, lp, pad_bias, H, E, cfg):
    a = mha(x, x, S, S, N, lp["attn"], H, E, cfg, pad_bias=pad_bias)
    x1 = linear_p(a, lp["attn"]["out_proj"], cfg, residual=x, ln=lp["ln1"])
    h = linear_p(x1, lp["w1"], cfg, relu=True)
    x2 = linear_p(h, lp["w2"], cfg, residual=x1, ln=lp["ln2"])
    return x2                                    # padded (Mp, Ep)


def decoder_layer(y, mem, St, Ss, N, lp, H, E, cfg):
    a = mha(y, y, St, St, N, lp["self_attn"], H, E, cfg, causal=True)
    y1 = linear_p(a, lp["self_attn"]["out_proj"], cfg, residual=y,
                  ln=lp["ln1"])
    # Reference never passes memory_key_padding_mask -> cross-attn unmasked.
    a = mha(y1, mem, St, Ss, N, lp["cross_attn"], H, E, cfg, cross=True)
    y2 = linear_p(a, lp["cross_attn"]["out_proj"], cfg, residual=y1,
                  ln=lp["ln2"])
    h = linear_p(y2, lp["w1"], cfg, relu=True)
    y3 = linear_p(h, lp["w2"], cfg, residual=y2, ln=lp["ln3"])
    return y3


def transformer_forward(prep, source, target, H, E, pad_idx, cfg):
    Ss, N = source.shape
    St, _ = target.shape

    # Embedding gathers stay in plain JAX (no Pallas gather needed here);
    # dropout = identity (eval mode).
    emb_src = (prep["src_word_emb"][source]
               + prep["src_pos_emb"][jnp.arange(Ss)][:, None, :])
    emb_tgt = (prep["tgt_word_emb"][target]
               + prep["tgt_pos_emb"][jnp.arange(St)][:, None, :])

    # Additive key-padding bias for encoder self-attention, (N, 1, Ss).
    pad_bias = jnp.where(source.T == pad_idx, NEG_INF, 0.0)
    pad_bias = pad_bias.astype(jnp.float32).reshape(N, 1, Ss)

    x = emb_src.reshape(Ss * N, E)
    for lp in prep["enc_layers"]:
        x = encoder_layer(x, Ss, N, lp, pad_bias, H, E, cfg)
    mem = layernorm_p(x, prep["enc_norm"], E, cfg)          # (Mp_s, Ep)

    y = emb_tgt.reshape(St * N, E)
    for lp in prep["dec_layers"]:
        y = decoder_layer(y, mem, St, Ss, N, lp, H, E, cfg)
    y = layernorm_p(y, prep["dec_norm"], E, cfg)

    out = linear_p(y, prep["fc"], cfg)                      # (Mp_t, Vt_p)
    Vt = prep["fc"]["O"]
    return out[:St * N, :Vt].reshape(St, N, Vt)


# --------------------------- parameter preparation ---------------------------
# Raw params store linear weights pre-transposed (in_features, out_features).
# prepare_params() pads them to tile multiples, casts to bf16, packs q/k/v
# slabs 128-aligned and folds the 1/sqrt(dh) scale into Wq ONCE, so the
# per-forward weight glue is eliminated.

def _prep_linear(w_t, b, cfg, chunks=1):
    K, O_total = w_t.shape
    Oc = O_total // chunks
    Kp = _round_up(K, 128)
    tk = min(cfg["tk"], Kp)
    while Kp % tk:
        tk -= 128
    Ocp = _round_up(Oc, 128)
    tn = min(cfg["tn"], Ocp)
    while Ocp % tn:
        tn -= 128

    ws = jnp.split(w_t, chunks, axis=1)
    bs = jnp.split(b, chunks)
    wp = jnp.concatenate(
        [jnp.pad(wc, ((0, Kp - K), (0, Ocp - Oc))) for wc in ws],
        axis=1).astype(MXU_DTYPE)
    bp = jnp.concatenate(
        [jnp.pad(bc, (0, Ocp - Oc)) for bc in bs]
    ).reshape(1, chunks * Ocp).astype(jnp.float32)
    return dict(w=wp, b=bp, Kp=Kp, Op=chunks * Ocp, tk=tk, tn=tn,
                O=Oc, Ocp=Ocp)


def _prep_attn(ap, E, H, cfg, cross=False):
    dh = E // H
    scale = 1.0 / (dh ** 0.5)
    wq, wk, wv = jnp.split(ap["w_in_t"], 3, axis=1)
    bq, bk, bv = jnp.split(ap["b_in"], 3)
    wq = wq * scale          # fold 1/sqrt(dh) into the Q projection
    bq = bq * scale
    prep = dict(out_proj=_prep_linear(ap["w_out_t"], ap["b_out"], cfg))
    if cross:
        prep["q_proj"] = _prep_linear(wq, bq, cfg)
        prep["kv_proj"] = _prep_linear(jnp.concatenate([wk, wv], axis=1),
                                       jnp.concatenate([bk, bv]), cfg,
                                       chunks=2)
    else:
        prep["in_proj"] = _prep_linear(jnp.concatenate([wq, wk, wv], axis=1),
                                       jnp.concatenate([bq, bk, bv]), cfg,
                                       chunks=3)
    return prep


def prepare_params(params, E, H, cfg):
    Ep = _round_up(E, 128)

    def ln(g, b):
        return (jnp.pad(g, (0, Ep - E)).reshape(1, Ep).astype(jnp.float32),
                jnp.pad(b, (0, Ep - E)).reshape(1, Ep).astype(jnp.float32))

    def ffn(lp):
        return dict(w1=_prep_linear(lp["w1_t"], lp["b1"], cfg),
                    w2=_prep_linear(lp["w2_t"], lp["b2"], cfg))

    enc_layers = []
    for lp in params["enc_layers"]:
        d = ffn(lp)
        d["attn"] = _prep_attn(lp["attn"], E, H, cfg)
        d["ln1"] = ln(lp["ln1_g"], lp["ln1_b"])
        d["ln2"] = ln(lp["ln2_g"], lp["ln2_b"])
        enc_layers.append(d)

    dec_layers = []
    for lp in params["dec_layers"]:
        d = ffn(lp)
        d["self_attn"] = _prep_attn(lp["self_attn"], E, H, cfg)
        d["cross_attn"] = _prep_attn(lp["cross_attn"], E, H, cfg, cross=True)
        d["ln1"] = ln(lp["ln1_g"], lp["ln1_b"])
        d["ln2"] = ln(lp["ln2_g"], lp["ln2_b"])
        d["ln3"] = ln(lp["ln3_g"], lp["ln3_b"])
        dec_layers.append(d)

    return dict(
        src_word_emb=params["src_word_emb"],
        src_pos_emb=params["src_pos_emb"],
        tgt_word_emb=params["tgt_word_emb"],
        tgt_pos_emb=params["tgt_pos_emb"],
        enc_layers=enc_layers,
        dec_layers=dec_layers,
        enc_norm=ln(params["enc_norm_g"], params["enc_norm_b"]),
        dec_norm=ln(params["dec_norm_g"], params["dec_norm_b"]),
        fc=_prep_linear(params["fc_w_t"], params["fc_b"], cfg),
        Ep=Ep,
    )


# ------------------------------ raw init params ------------------------------

def init_params(key, E, Vs, Vt, H, n_enc, n_dec, dff, max_len):
    keys = iter(jax.random.split(key, 512))

    def w(shape, scale=0.02):
        return jax.random.normal(next(keys), shape, jnp.float32) * scale

    def attn_p():
        return dict(w_in_t=w((E, 3 * E)), b_in=jnp.zeros((3 * E,), jnp.float32),
                    w_out_t=w((E, E)), b_out=jnp.zeros((E,), jnp.float32))

    def ffn_ln(n_ln):
        d = dict(w1_t=w((E, dff)), b1=jnp.zeros((dff,), jnp.float32),
                 w2_t=w((dff, E)), b2=jnp.zeros((E,), jnp.float32))
        for i in range(1, n_ln + 1):
            d[f"ln{i}_g"] = jnp.ones((E,), jnp.float32)
            d[f"ln{i}_b"] = jnp.zeros((E,), jnp.float32)
        return d

    def enc_layer_p():
        d = ffn_ln(2)
        d["attn"] = attn_p()
        return d

    def dec_layer_p():
        d = ffn_ln(3)
        d["self_attn"] = attn_p()
        d["cross_attn"] = attn_p()
        return d

    return dict(
        src_word_emb=w((Vs, E), 1.0),
        src_pos_emb=w((max_len, E), 1.0),
        tgt_word_emb=w((Vt, E), 1.0),
        # TODO(synk): reference never defines target_position_embedding (bug);
        # added here to realize the forward pass it attempts to run.
        tgt_pos_emb=w((max_len, E), 1.0),
        enc_layers=[enc_layer_p() for _ in range(n_enc)],
        dec_layers=[dec_layer_p() for _ in range(n_dec)],
        enc_norm_g=jnp.ones((E,), jnp.float32),
        enc_norm_b=jnp.zeros((E,), jnp.float32),
        dec_norm_g=jnp.ones((E,), jnp.float32),
        dec_norm_b=jnp.zeros((E,), jnp.float32),
        fc_w_t=w((E, Vt)),
        fc_b=jnp.zeros((Vt,), jnp.float32),
    )


# ---------------------------------- main ----------------------------------

if __name__ == "__main__":
    E, H = 32, 4
    Vs, Vt = 50, 60
    n_enc, n_dec = 2, 2
    dff = 64                 # forward_expansion == dim_feedforward in the ref
    max_len = 16
    pad_idx = 0
    Ss, St, N = 8, 6, 2

    cfg = make_cfg()

    key = jax.random.PRNGKey(0)
    pkey, skey, tkey = jax.random.split(key, 3)
    raw_params = init_params(pkey, E, Vs, Vt, H, n_enc, n_dec, dff, max_len)
    prep = prepare_params(raw_params, E, H, cfg)   # one-time weight layout

    source = jax.random.randint(skey, (Ss, N), 1, Vs).astype(jnp.int32)
    source = source.at[-2:, 0].set(pad_idx)        # add some padding tokens
    target = jax.random.randint(tkey, (St, N), 1, Vt).astype(jnp.int32)

    out = transformer_forward(prep, source, target, H, E, pad_idx, cfg)
    out = jax.block_until_ready(out)

    assert out.shape == (St, N, Vt), out.shape
    assert bool(jnp.all(jnp.isfinite(out)))
    print("KERNEL_OK")
</pallas_src>

<mosaic_0001>
module attributes {stable_mosaic.version = 11 : i64} {
  func.func @_linear_kernel(%arg0: i32, %arg1: i32, %arg2: i32, %arg3: memref<16x128xf32, #tpu.memory_space<vmem>>, %arg4: memref<128x128xbf16, #tpu.memory_space<vmem>>, %arg5: memref<1x128xf32, #tpu.memory_space<vmem>>, %arg6: memref<16x128xf32, #tpu.memory_space<vmem>>, %arg7: memref<16x128xf32, #tpu.memory_space<vmem>>) attributes {dimension_semantics = [#tpu.dimension_semantics<parallel>, #tpu.dimension_semantics<parallel>, #tpu.dimension_semantics<arbitrary>], iteration_bounds = array<i64: 1, 3, 1>, scalar_prefetch = 0 : i64, scratch_operands = 1 : i64, tpu.core_type = #tpu.core_type<tc>, window_params = [{transform_indices = @transform_0, window_bounds = array<i64: 16, 128>}, {transform_indices = @transform_1, window_bounds = array<i64: 128, 128>}, {transform_indices = @transform_2, window_bounds = array<i64: 1, 128>}, {transform_indices = @transform_3, window_bounds = array<i64: 16, 128>}]} {
    %c0_i32 = arith.constant 0 : i32
    %0 = arith.cmpi eq, %arg2, %c0_i32 : i32
    %1 = arith.extui %0 : i1 to i32
    %c0_i32_0 = arith.constant 0 : i32
    %2 = arith.cmpi ne, %1, %c0_i32_0 : i32
    scf.if %2 {
      %cst_10 = arith.constant 0.000000e+00 : f32
      %13 = vector.broadcast %cst_10 : f32 to vector<16x128xf32>
      %c0_11 = arith.constant 0 : index
      %c0_12 = arith.constant 0 : index
      %14 = vector.load %arg7[%c0_11, %c0_12] : memref<16x128xf32, #tpu.memory_space<vmem>>, vector<16x128xf32>
      tpu.vector_store %arg7[%c0_11, %c0_12], %13 {strides = array<i32>} : memref<16x128xf32, #tpu.memory_space<vmem>>, vector<16x128xf32>,
    } else {
    }
    %c0 = arith.constant 0 : index
    %c0_1 = arith.constant 0 : index
    %3 = vector.load %arg7[%c0, %c0_1] : memref<16x128xf32, #tpu.memory_space<vmem>>, vector<16x128xf32>
    %c0_2 = arith.constant 0 : index
    %c0_3 = arith.constant 0 : index
    %4 = vector.load %arg3[%c0_2, %c0_3] : memref<16x128xf32, #tpu.memory_space<vmem>>, vector<16x128xf32>
    %5 = arith.truncf %4 : vector<16x128xf32> to vector<16x128xbf16>
    %c0_4 = arith.constant 0 : index
    %c0_5 = arith.constant 0 : index
    %6 = vector.load %arg4[%c0_4, %c0_5] : memref<128x128xbf16, #tpu.memory_space<vmem>>, vector<128x128xbf16>
    %cst = arith.constant dense<0.000000e+00> : vector<16x128xf32>
    %7 = tpu.matmul %5, %6, %cst {dimension_numbers = #tpu.dot_dimension_numbers<[1], [0], [0], [1], [0, 0, 1, 1], [], []>} : vector<16x128xbf16>, vector<128x128xbf16>, vector<16x128xf32> -> vector<16x128xf32>
    %8 = arith.addf %3, %7 : vector<16x128xf32>
    %c0_6 = arith.constant 0 : index
    %c0_7 = arith.constant 0 : index
    %9 = vector.load %arg7[%c0_6, %c0_7] : memref<16x128xf32, #tpu.memory_space<vmem>>, vector<16x128xf32>
    tpu.vector_store %arg7[%c0_6, %c0_7], %8 {strides = array<i32>} : memref<16x128xf32, #tpu.memory_space<vmem>>, vector<16x128xf32>,
    %c0_i32_8 = arith.constant 0 : i32
    %10 = arith.cmpi eq, %arg2, %c0_i32_8 : i32
    %11 = arith.extui %10 : i1 to i32
    %c0_i32_9 = arith.constant 0 : i32
    %12 = arith.cmpi ne, %11, %c0_i32_9 : i32
    scf.if %12 {
      %c0_10 = arith.constant 0 : index
      %c0_11 = arith.constant 0 : index
      %13 = vector.load %arg7[%c0_10, %c0_11] : memref<16x128xf32, #tpu.memory_space<vmem>>, vector<16x128xf32>
      %c0_12 = arith.constant 0 : index
      %c0_13 = arith.constant 0 : index
      %14 = vector.load %arg5[%c0_12, %c0_13] : memref<1x128xf32, #tpu.memory_space<vmem>>, vector<1x128xf32>
      %15 = vector.broadcast %14 : vector<1x128xf32> to vector<16x128xf32>
      %16 = arith.addf %13, %15 : vector<16x128xf32>
      %c0_14 = arith.constant 0 : index
      %c0_15 = arith.constant 0 : index
      %17 = vector.load %arg6[%c0_14, %c0_15] : memref<16x128xf32, #tpu.memory_space<vmem>>, vector<16x128xf32>
      tpu.vector_store %arg6[%c0_14, %c0_15], %16 {strides = array<i32>} : memref<16x128xf32, #tpu.memory_space<vmem>>, vector<16x128xf32>,
    } else {
    }
    return
  }
  func.func @transform_0(%arg0: i32, %arg1: i32, %arg2: i32) -> (i32, i32) {
    %c0_i32 = arith.constant 0 : i32
    return %arg0, %arg2 : i32, i32
  }
  func.func @transform_1(%arg0: i32, %arg1: i32, %arg2: i32) -> (i32, i32) {
    %c0_i32 = arith.constant 0 : i32
    return %arg2, %arg1 : i32, i32
  }
  func.func @transform_2(%arg0: i32, %arg1: i32, %arg2: i32) -> (i32, i32) {
    %c0_i32 = arith.constant 0 : i32
    %c0_i32_0 = arith.constant 0 : i32
    return %c0_i32, %arg1 : i32, i32
  }
  func.func @transform_3(%arg0: i32, %arg1: i32, %arg2: i32) -> (i32, i32) {
    %c0_i32 = arith.constant 0 : i32
    return %arg0, %arg1 : i32, i32
  }
}

</mosaic_0001>

<llo_original>
// kernel: tpu_custom_call.1
$region0: #{tpu_custom_call.1}
  #allocation0 [shape = 'u32[]', space=smem, size = 0x4, offset = 0x4, fixed_abs, tag = 'smem constant byte address 0x4 - core index']
  #allocation1 [shape = 'u32[72,128]{1,0:T(1,128)}', space=vmem, size = 0x9000, scoped, tag = 'internal scratch']
  #allocation2 [shape = 'f32[16,128]{1,0:T(8,128)}', space=vmem, size = 0x2000, scoped, tag = 'scratch operand']
  %s0 = inlined_call_operand.hbm [shape: f32[16,128], index: 0, kind: input, shape index: {}]
  %s1 = inlined_call_operand.hbm [shape: bf16[128,384], index: 1, kind: input, shape index: {}]
  %s2 = inlined_call_operand.hbm [shape: f32[1,384], index: 2, kind: input, shape index: {}]
  %s3 = inlined_call_operand.hbm [shape: f32[16,384], index: 3, kind: output, shape index: {}]
  %s4 = sld [smem:[#allocation0]]
  $region65: #{tpu_custom_call.1} parent=0
    _
  %s6 = ssub.s32 1, %s4
  %s7 = scalar_select 0, %s6, %s4
  $region1: #{tpu_custom_call.1} parent=0
    #allocation3 [shape = 'u8[8192]{0}', space=vmem, size = 0x2000, scoped, tag = 'input window, operand 0, single buffered']
    #allocation4 [shape = 's32[2]{0}', space=sflag, size = 0x8, scoped, tag = 'scoped memory for tpu_custom_call.1']
    #allocation5 [shape = 's32[2]{0}', space=sflag, size = 0x8, scoped, tag = 'scoped memory for tpu_custom_call.1']
    #allocation6 [shape = 'u8[65536]{0}', space=vmem, size = 0x10000, scoped, tag = 'input window, operand 1']
    #allocation7 [shape = 's32[2]{0}', space=sflag, size = 0x8, scoped, tag = 'scoped memory for tpu_custom_call.1']
    #allocation8 [shape = 'u8[1024]{0}', space=vmem, size = 0x400, scoped, tag = 'input window, operand 2']
    #allocation9 [shape = 'u8[16384]{0}', space=vmem, size = 0x4000, scoped, tag = 'output window, operand 0']
    %8 = vsyncpa [#allocation4], 0
    %9 = vsyncpa [#allocation7], 0
    %s10 = scalar_lea.sflag [#allocation7], 1
    %11 = vsyncpa %s10, 0
    %12 = vsyncpa [#allocation5], 0
    %s13 = scalar_lea.sflag [#allocation5], 1
    %14 = vsyncpa %s13, 0
    loop: start=0, step=1, limit=5
    $region2: #{tpu_custom_call.1} parent=1 // loop_pre_header
      _
    $region3: #{tpu_custom_call.1} parent=1 // loop_header
      %s16 = sphi 0, %s20
      %p17 = scmp.ge.s32.totalorder %s16, 5
      %s23 = sphi 0, %s42
      %s24 = sphi 0, %s38
      %s25 = sphi 0, %s34
      %s26 = sphi 0, %s23
      %s27 = sphi 0, %s24
      %s28 = sphi 0, %s25
      %s29 = sphi 0, %s26
      %s30 = sphi 0, %s27
      %s31 = sphi 0, %s28
      %s47 = sphi 0, %s49
      %s50 = sphi 0, %s47
      %s51 = sphi 0, %s50
      %s67 = sphi 0, %s51
      %s75 = sphi 0, %s77
      %s78 = sphi 0, %s75
      %s79 = sphi 0, %s78
      %s95 = sphi 0, %s79
      %s101 = sphi 0, %s103
      %s104 = sphi 0, %s101
      %s105 = sphi 0, %s104
      %s121 = sphi 0, %s105
      %s129 = sphi 0, %s131
      %s132 = sphi 0, %s129
      %s133 = sphi 0, %s132
      %s149 = sphi 0, %s133
    $region4: #{tpu_custom_call.1} parent=1 // loop_header_branch
      %19 = sbr.rel (%p17) target = $region8
    $region5: #{tpu_custom_call.1} parent=1 // loop_body
      %s21 = ssub.s32 %s16, 1
      %s22 = ssub.s32 %s16, 2
      %s32 = sadd.s32 1, %s25
      %p33 = scmp.ge.s32.totalorder %s32, 1
      %s34 = scalar_select %p33, 0, %s32
      %s35 = sadd.s32 1, %s24
      %s36 = scalar_select %p33, %s35, %s24
      %p37 = scmp.ge.s32.totalorder %s36, 3
      %s38 = scalar_select %p37, 0, %s36
      %s39 = sadd.s32 1, %s23
      %s40 = scalar_select %p37, %s39, %s23
      %p41 = scmp.ge.s32.totalorder %s40, 1
      %s42 = scalar_select %p41, 0, %s40
      %s43 = ssub.s32 %s23, %s42
      %s44 = ssub.s32 %s25, %s34
      %s45 = sor.u32 %s43, %s44
      %p46 = scmp.eq.s32.totalorder %s45, 0
      %s48 = sadd.s32 %s47, 1
      %s49 = scalar_select %p46, %s47, %s48
      %p52 = pneg %p46
      %p53 = scmp.eq.s32.totalorder %s16, 2
      %p54 = por %p52, %p53
      %p55 = scmp.ne.s32.totalorder %s47, %s50
      %p56 = scmp.eq.s32.totalorder %s16, 0
      %p57 = por %p55, %p56
      %p58 = scmp.ne.s32.totalorder %s47, %s50
      %p59 = scmp.eq.s32.totalorder %s21, 2
      %p60 = por %p58, %p59
      %p61 = scmp.ne.s32.totalorder %s50, %s51
      %p62 = scmp.eq.s32.totalorder %s21, 0
      %p63 = por %p61, %p62
      %p64 = scmp.ne.s32.totalorder %s50, %s51
      %p65 = scmp.eq.s32.totalorder %s22, 2
      %p66 = por %p64, %p65
      %p68 = scmp.ne.s32.totalorder %s51, %s67
      %p69 = scmp.eq.s32.totalorder %s22, 0
      %p70 = por %p68, %p69
      %s71 = ssub.s32 %s25, %s34
      %s72 = ssub.s32 %s24, %s38
      %s73 = sor.u32 %s71, %s72
      %p74 = scmp.eq.s32.totalorder %s73, 0
      %s76 = sadd.s32 %s75, 1
      %s77 = scalar_select %p74, %s75, %s76
      %p80 = pneg %p74
      %p81 = scmp.eq.s32.totalorder %s16, 2
      %p82 = por %p80, %p81
      %p83 = scmp.ne.s32.totalorder %s75, %s78
      %p84 = scmp.eq.s32.totalorder %s16, 0
      %p85 = por %p83, %p84
      %p86 = scmp.ne.s32.totalorder %s75, %s78
      %p87 = scmp.eq.s32.totalorder %s21, 2
      %p88 = por %p86, %p87
      %p89 = scmp.ne.s32.totalorder %s78, %s79
      %p90 = scmp.eq.s32.totalorder %s21, 0
      %p91 = por %p89, %p90
      %p92 = scmp.ne.s32.totalorder %s78, %s79
      %p93 = scmp.eq.s32.totalorder %s22, 2
      %p94 = por %p92, %p93
      %p96 = scmp.ne.s32.totalorder %s79, %s95
      %p97 = scmp.eq.s32.totalorder %s22, 0
      %p98 = por %p96, %p97
      %s99 = ssub.s32 %s24, %s38
      %p100 = scmp.eq.s32.totalorder %s99, 0
      %s102 = sadd.s32 %s101, 1
      %s103 = scalar_select %p100, %s101, %s102
      %p106 = pneg %p100
      %p107 = scmp.eq.s32.totalorder %s16, 2
      %p108 = por %p106, %p107
      %p109 = scmp.ne.s32.totalorder %s101, %s104
      %p110 = scmp.eq.s32.totalorder %s16, 0
      %p111 = por %p109, %p110
      %p112 = scmp.ne.s32.totalorder %s101, %s104
      %p113 = scmp.eq.s32.totalorder %s21, 2
      %p114 = por %p112, %p113
      %p115 = scmp.ne.s32.totalorder %s104, %s105
      %p116 = scmp.eq.s32.totalorder %s21, 0
      %p117 = por %p115, %p116
      %p118 = scmp.ne.s32.totalorder %s104, %s105
      %p119 = scmp.eq.s32.totalorder %s22, 2
      %p120 = por %p118, %p119
      %p122 = scmp.ne.s32.totalorder %s105, %s121
      %p123 = scmp.eq.s32.totalorder %s22, 0
      %p124 = por %p122, %p123
      %s125 = ssub.s32 %s23, %s42
      %s126 = ssub.s32 %s24, %s38
      %s127 = sor.u32 %s125, %s126
      %p128 = scmp.eq.s32.totalorder %s127, 0
      %s130 = sadd.s32 %s129, 1
      %s131 = scalar_select %p128, %s129, %s130
      %p134 = pneg %p128
      %p135 = scmp.eq.s32.totalorder %s16, 2
      %p136 = por %p134, %p135
      %p137 = scmp.ne.s32.totalorder %s129, %s132
      %p138 = scmp.eq.s32.totalorder %s16, 0
      %p139 = por %p137, %p138
      %p140 = scmp.ne.s32.totalorder %s129, %s132
      %p141 = scmp.eq.s32.totalorder %s21, 2
      %p142 = por %p140, %p141
      %p143 = scmp.ne.s32.totalorder %s132, %s133
      %p144 = scmp.eq.s32.totalorder %s21, 0
      %p145 = por %p143, %p144
      %p146 = scmp.ne.s32.totalorder %s132, %s133
      %p147 = scmp.eq.s32.totalorder %s22, 2
      %p148 = por %p146, %p147
      %p150 = scmp.ne.s32.totalorder %s133, %s149
      %p151 = scmp.eq.s32.totalorder %s22, 0
      %p152 = por %p150, %p151
      %p153 = scmp.le.s32.totalorder 1, %s16
      %p154 = scmp.lt.s32.totalorder %s16, 4
      %p155 = pnand %p153, %p154
      %p156 = pneg %p155
      // Predicated region
      $region9: #{tpu_custom_call.1} parent=5 // pred_check
        _
      $region10: #{tpu_custom_call.1} parent=5 // pred_check_branch
        %158 = sbr.rel (%p155) target = $region12
      $region11: #{tpu_custom_call.1} parent=5 // pred_region
        %s159 = ssub.s32 %s16, 1
        // Predicated region
        $region13: #{tpu_custom_call.1} parent=11 // pred_check
          %p160 = pneg %p63
        $region14: #{tpu_custom_call.1} parent=11 // pred_check_branch
          %162 = sbr.rel (%p160) target = $region16
        $region15: #{tpu_custom_call.1} parent=11 // pred_region
          %s163 = smul.u32 2, %s26
          %165 = vsyncadd [#allocation4], 0
          %s166 = sadd.s32 %s28, %s163
          %s167 = smul.addr %s166, 8
          %s168 = scalar_lea.hbm %s0, %s167
          %s169 = sshll.u32 %s168, 4
          %s170 = int_to_ptr.hbm [resolvable:$true] %s169
          %s171 = sshll.u32 [#allocation3], 4
          %s172 = int_to_ptr.vmem [resolvable:$true] %s171
          %177 = dma.hbm_to_vmem [thread:$0]  %s170, 256, %s172, [#allocation4], 128, 128, 8
        $region16: #{tpu_custom_call.1} parent=11 // pred_fallthru
          _
      $region12: #{tpu_custom_call.1} parent=5 // pred_fallthru
        _
      %p178 = scmp.lt.s32.totalorder %s16, 3
      // Predicated region
      $region17: #{tpu_custom_call.1} parent=5 // pred_check
        %p179 = pneg %p178
      $region18: #{tpu_custom_call.1} parent=5 // pred_check_branch
        %181 = sbr.rel (%p179) target = $region20
      $region19: #{tpu_custom_call.1} parent=5 // pred_region
        // Predicated region
        $region21: #{tpu_custom_call.1} parent=19 // pred_check
          %p182 = pneg %p85
        $region22: #{tpu_custom_call.1} parent=19 // pred_check_branch
          %184 = sbr.rel (%p182) target = $region24
        $region23: #{tpu_custom_call.1} parent=19 // pred_region
          %s185 = sand.u32 %s16, 1
          %s186 = scalar_lea.sflag [#allocation7], %s185
          %s187 = sand.u32 %s75, 1
          %s188 = smul.addr %s187, 64
          %s189 = scalar_lea.vmem [#allocation6], %s188
          %s190 = smul.u32 16, %s25
          %192 = vsyncadd %s186, 0
          %s193 = smul.addr %s190, 3
          %s194 = sadd.s32 %s24, %s193
          %s195 = smul.addr %s194, 4
          %s196 = scalar_lea.hbm %s1, %s195
          %s197 = sshll.u32 %s196, 4
          %s198 = int_to_ptr.hbm [resolvable:$true] %s197
          %s199 = sshll.u32 %s189, 4
          %s200 = int_to_ptr.vmem [resolvable:$true] %s199
          %205 = dma.hbm_to_vmem [thread:$0]  %s198, 1024, %s200, %s186, 192, 64, 4
        $region24: #{tpu_custom_call.1} parent=19 // pred_fallthru
          _
        // Predicated region
        $region25: #{tpu_custom_call.1} parent=19 // pred_check
          %p206 = pneg %p111
        $region26: #{tpu_custom_call.1} parent=19 // pred_check_branch
          %208 = sbr.rel (%p206) target = $region28
        $region27: #{tpu_custom_call.1} parent=19 // pred_region
          %s209 = sand.u32 %s16, 1
          %s210 = scalar_lea.sflag [#allocation7], %s209
          %s211 = sand.u32 %s101, 1
          %s212 = scalar_lea.vmem [#allocation8], %s211
          %214 = vsyncadd %s210, 0
          %s215 = scalar_lea.hbm %s2, %s24
          %s217 = sshll.u32 %s215, 4
          %s218 = int_to_ptr.hbm [resolvable:$true] %s217
          %s219 = sshll.u32 %s212, 4
          %s220 = int_to_ptr.vmem [resolvable:$true] %s219
          %222 = dma.hbm_to_vmem [thread:$0]  %s218, 16, %s220, %s210
        $region28: #{tpu_custom_call.1} parent=19 // pred_fallthru
          _
      $region20: #{tpu_custom_call.1} parent=5 // pred_fallthru
        _
      %p223 = scmp.le.s32.totalorder 1, %s16
      %p224 = scmp.lt.s32.totalorder %s16, 4
      %p225 = pnand %p223, %p224
      %p226 = pneg %p225
      // Predicated region
      $region29: #{tpu_custom_call.1} parent=5 // pred_check
        _
      $region30: #{tpu_custom_call.1} parent=5 // pred_check_branch
        %228 = sbr.rel (%p225) target = $region32
      $region31: #{tpu_custom_call.1} parent=5 // pred_region
        %s229 = ssub.s32 %s16, 1
        // Predicated region
        $region33: #{tpu_custom_call.1} parent=31 // pred_check
          %p230 = pneg %p63
        $region34: #{tpu_custom_call.1} parent=31 // pred_check_branch
          %232 = sbr.rel (%p230) target = $region36
        $region35: #{tpu_custom_call.1} parent=31 // pred_region
          %234 = dma.done [#allocation4], 256
        $region36: #{tpu_custom_call.1} parent=31 // pred_fallthru
          _
        %s235 = sand.u32 %s21, 1
        %s236 = scalar_lea.sflag [#allocation7], %s235
        %s237 = sand.u32 %s78, 1
        %s238 = smul.addr %s237, 64
        %s239 = scalar_lea.vmem [#allocation6], %s238
        // Predicated region
        $region37: #{tpu_custom_call.1} parent=31 // pred_check
          %p240 = pneg %p91
        $region38: #{tpu_custom_call.1} parent=31 // pred_check_branch
          %242 = sbr.rel (%p240) target = $region40
        $region39: #{tpu_custom_call.1} parent=31 // pred_region
          %244 = dma.done %s236, 1024
        $region40: #{tpu_custom_call.1} parent=31 // pred_fallthru
          _
        %s245 = sand.u32 %s21, 1
        %s246 = scalar_lea.sflag [#allocation7], %s245
        %s247 = sand.u32 %s104, 1
        %s248 = scalar_lea.vmem [#allocation8], %s247
        // Predicated region
        $region41: #{tpu_custom_call.1} parent=31 // pred_check
          %p249 = pneg %p117
        $region42: #{tpu_custom_call.1} parent=31 // pred_check_branch
          %251 = sbr.rel (%p249) target = $region44
        $region43: #{tpu_custom_call.1} parent=31 // pred_region
          %253 = dma.done %s246, 16
        $region44: #{tpu_custom_call.1} parent=31 // pred_fallthru
          _
        %p254 = pneg %p63
        %p255 = pneg %p60
        %s256 = sand.u32 %s21, 1
        %s257 = scalar_lea.sflag [#allocation7], %s256
        %s258 = sand.u32 %s78, 1
        %s259 = smul.addr %s258, 64
        %s260 = scalar_lea.vmem [#allocation6], %s259
        %p261 = pneg %p91
        %p262 = pneg %p88
        %s263 = sand.u32 %s21, 1
        %s264 = scalar_lea.sflag [#allocation7], %s263
        %s265 = sand.u32 %s104, 1
        %s266 = scalar_lea.vmem [#allocation8], %s265
        %p267 = pneg %p117
        %p268 = pneg %p114
        %p269 = pneg %p145
        %p270 = pneg %p142
        %s271 = sand.u32 %s132, 1
        %s272 = scalar_lea.sflag [#allocation5], %s271
        %s273 = sand.u32 %s132, 1
        %s274 = smul.addr %s273, 16
        %s275 = scalar_lea.vmem [#allocation9], %s274
        %s276 = smul.u32 2, %s26
        %s277 = smul.u32 16, %s28
        %s278 = smul.u32 2, %s26
        %p279 = scmp.eq.s32.totalorder %s28, 0
        // Predicated region
        $region45: #{tpu_custom_call.1} parent=31 // pred_check
          %p280 = pneg %p279
        $region46: #{tpu_custom_call.1} parent=31 // pred_check_branch
          %282 = sbr.rel (%p280) target = $region48
        $region47: #{tpu_custom_call.1} parent=31 // pred_region
          %283 = vst [vmem:[#allocation2] sm:$0xff] 0.0
          %284 = vst [vmem:[#allocation2 + $0x8] sm:$0xff] 0.0
        $region48: #{tpu_custom_call.1} parent=31 // pred_fallthru
          _
        %v285 = vld [vmem:[#allocation2] sm:$0xff]
        %v286 = vld [vmem:[#allocation2 + $0x8] sm:$0xff]
        %v287 = vld [vmem:[#allocation3] sm:$0xff]
        %v288 = vld [vmem:[#allocation3 + $0x8] sm:$0xff]
        %v289 = vpack.c.bf16 %v288, %v287
        %v290 = vld [vmem:[%s239] sm:$0xf]
        %v291 = vld [vmem:[%s239 + $0x4] sm:$0xf]
        %v292 = vld [vmem:[%s239 + $0x8] sm:$0xf]
        %v293 = vld [vmem:[%s239 + $0xc] sm:$0xf]
        %v294 = vld [vmem:[%s239 + $0x10] sm:$0xf]
        %v295 = vld [vmem:[%s239 + $0x14] sm:$0xf]
        %v296 = vld [vmem:[%s239 + $0x18] sm:$0xf]
        %v297 = vld [vmem:[%s239 + $0x1c] sm:$0xf]
        %v298 = vld [vmem:[%s239 + $0x20] sm:$0xf]
        %v299 = vld [vmem:[%s239 + $0x24] sm:$0xf]
        %v300 = vld [vmem:[%s239 + $0x28] sm:$0xf]
        %v301 = vld [vmem:[%s239 + $0x2c] sm:$0xf]
        %v302 = vld [vmem:[%s239 + $0x30] sm:$0xf]
        %v303 = vld [vmem:[%s239 + $0x34] sm:$0xf]
        %v304 = vld [vmem:[%s239 + $0x38] sm:$0xf]
        %v305 = vld [vmem:[%s239 + $0x3c] sm:$0xf]
        %v322 = vunpack.c.l.b16 %v290
        %v323 = vunpack.c.l.b16 %v291
        %v324 = vunpack.c.l.b16 %v292
        %v325 = vunpack.c.l.b16 %v293
        %v326 = vunpack.c.l.b16 %v294
        %v327 = vunpack.c.l.b16 %v295
        %v328 = vunpack.c.l.b16 %v296
        %v329 = vunpack.c.l.b16 %v297
        %v330 = vunpack.c.l.b16 %v298
        %v331 = vunpack.c.l.b16 %v299
        %v332 = vunpack.c.l.b16 %v300
        %v333 = vunpack.c.l.b16 %v301
        %v334 = vunpack.c.l.b16 %v302
        %v335 = vunpack.c.l.b16 %v303
        %v336 = vunpack.c.l.b16 %v304
        %v337 = vunpack.c.l.b16 %v305
        %v338 = vpack.c.b16 %v323, %v322
        %v339 = vpack.c.b16 %v325, %v324
        %v340 = vpack.c.b16 %v327, %v326
        %v341 = vpack.c.b16 %v329, %v328
        %v342 = vpack.c.b16 %v331, %v330
        %v343 = vpack.c.b16 %v333, %v332
        %v344 = vpack.c.b16 %v335, %v334
        %v345 = vpack.c.b16 %v337, %v336
        %354 = vmatpush.bf16.msra.mxu0 %v345
        %355 = vmatpush.bf16.msra.mxu0 %v344
        %356 = vmatpush.bf16.msra.mxu0 %v343
        %357 = vmatpush.bf16.msra.mxu0 %v342
        %358 = vmatpush.bf16.msra.mxu0 %v341
        %359 = vmatpush.bf16.msra.mxu0 %v340
        %360 = vmatpush.bf16.msra.mxu0 %v339
        %361 = vmatpush.bf16.msra.mxu0 %v338
        %362 = vmatmul.bf16.gmra.mxu0 %v289
        %v363 = vpop.f32.mrf.mxu0
        %v364 = vadd.f32 0.0, %v363
        %v365 = vpop.f32.mrf.mxu0
        %v366 = vadd.f32 0.0, %v365
        %367 = vdwg.mxu0
        %v368 = vadd.f32 %v285, %v364
        %v369 = vadd.f32 %v286, %v366
        %370 = vst [vmem:[#allocation2] sm:$0xff] %v368
        %371 = vst [vmem:[#allocation2 + $0x8] sm:$0xff] %v369
        // Predicated region
        $region49: #{tpu_custom_call.1} parent=31 // pred_check
          %p372 = pneg %p279
        $region50: #{tpu_custom_call.1} parent=31 // pred_check_branch
          %374 = sbr.rel (%p372) target = $region52
        $region51: #{tpu_custom_call.1} parent=31 // pred_region
          %v375 = vld [vmem:[#allocation2] sm:$0xff]
          %v376 = vld [vmem:[#allocation2 + $0x8] sm:$0xff]
          %v377 = vld [vmem:[%s248] sm:$0x1]
          %v379 = vperm.slane %v377, 0
          %v381 = vadd.f32 %v375, %v379
          %v382 = vadd.f32 %v376, %v379
          %383 = vst [vmem:[%s275] sm:$0xff] %v381
          %384 = vst [vmem:[%s275 + $0x8] sm:$0xff] %v382
        $region52: #{tpu_custom_call.1} parent=31 // pred_fallthru
          _
        %s385 = sand.u32 %s132, 1
        %s386 = scalar_lea.sflag [#allocation5], %s385
        %s387 = sand.u32 %s132, 1
        %s388 = smul.addr %s387, 16
        %s389 = scalar_lea.vmem [#allocation9], %s388
        // Predicated region
        $region53: #{tpu_custom_call.1} parent=31 // pred_check
          %p390 = pneg %p142
        $region54: #{tpu_custom_call.1} parent=31 // pred_check_branch
          %392 = sbr.rel (%p390) target = $region56
        $region55: #{tpu_custom_call.1} parent=31 // pred_region
          %s393 = smul.u32 2, %s26
          %395 = vsyncadd %s386, 0
          %s396 = smul.addr %s393, 3
          %s397 = sadd.s32 %s27, %s396
          %s398 = smul.addr %s397, 8
          %s399 = scalar_lea.hbm %s3, %s398
          %s400 = sshll.u32 %s389, 4
          %s401 = int_to_ptr.vmem [resolvable:$true] %s400
          %s402 = sshll.u32 %s399, 4
          %s403 = int_to_ptr.hbm [resolvable:$true] %s402
          %408 = dma.vmem_to_hbm [thread:$0]  %s401, 256, %s403, %s386, 128, 384, 8
        $region56: #{tpu_custom_call.1} parent=31 // pred_fallthru
          _
      $region32: #{tpu_custom_call.1} parent=5 // pred_fallthru
        _
      %p409 = scmp.le.s32.totalorder 2, %s16
      // Predicated region
      $region57: #{tpu_custom_call.1} parent=5 // pred_check
        %p410 = pneg %p409
      $region58: #{tpu_custom_call.1} parent=5 // pred_check_branch
        %412 = sbr.rel (%p410) target = $region60
      $region59: #{tpu_custom_call.1} parent=5 // pred_region
        %s413 = ssub.s32 %s16, 2
        // Predicated region
        $region61: #{tpu_custom_call.1} parent=59 // pred_check
          %p414 = pneg %p148
        $region62: #{tpu_custom_call.1} parent=59 // pred_check_branch
          %416 = sbr.rel (%p414) target = $region64
        $region63: #{tpu_custom_call.1} parent=59 // pred_region
          %s417 = sand.u32 %s133, 1
          %s418 = scalar_lea.sflag [#allocation5], %s417
          %s419 = sand.u32 %s133, 1
          %s420 = smul.addr %s419, 16
          %s421 = scalar_lea.vmem [#allocation9], %s420
          %423 = dma.done %s418, 256
        $region64: #{tpu_custom_call.1} parent=59 // pred_fallthru
          _
      $region60: #{tpu_custom_call.1} parent=5 // pred_fallthru
        _
    $region6: #{tpu_custom_call.1} parent=1 // loop_footer
      %s20 = sadd.s32 1, %s16
    $region7: #{tpu_custom_call.1} parent=1 // loop_footer_branch
      %15 = sbr.rel target = $region3
    $region8: #{tpu_custom_call.1} parent=1 // loop_exit
      _
    %424 = vsyncpa [#allocation4], 1
    %s425 = scalar_lea.sflag [#allocation4], 1
    %426 = vsyncpa %s425, 1
    %427 = vsyncpa [#allocation7], 1
    %s428 = scalar_lea.sflag [#allocation7], 1
    %429 = vsyncpa %s428, 1
    %430 = vsyncpa [#allocation5], 1
    %s431 = scalar_lea.sflag [#allocation5], 1
    %432 = vsyncpa %s431, 1

</llo_original>
